<compile_context>
chip_gen: v5e
topology: v5e:2x2
jax: 0.10.0
libtpu: 0.0.40
codegen_flags: <defaults>
</compile_context>

<pallas_src>
import numpy as np
import jax
import jax.numpy as jnp
from jax import lax
from jax.experimental import pallas as pl
from jax.experimental.pallas import tpu as pltpu


def _deconv_bn_relu_kernel(xg_ref, w_ref, gamma_ref, beta_ref, o_ref):
    kc = pl.program_id(0)

    @pl.when(kc == 0)
    def _():
        o_ref[...] = jnp.zeros_like(o_ref)

    # Single accumulator update per grid step: the sum over kernel offsets is
    # folded into the matmul contraction (K*Cin axis).
    o_ref[...] += jnp.dot(w_ref[...], xg_ref[...],
                          preferred_element_type=jnp.float32)

    # Fused BatchNorm (training semantics) + ReLU on the last contraction step.
    @pl.when(kc == pl.num_programs(0) - 1)
    def _():
        acc = o_ref[...]                              # (Cout_pad, N), N = lanes
        n = acc.shape[1]
        mean = jnp.sum(acc, axis=1, keepdims=True) / n
        diff = acc - mean
        var = jnp.sum(diff * diff, axis=1, keepdims=True) / n
        xhat = diff * lax.rsqrt(var + 1e-5)
        out = xhat * gamma_ref[...] + beta_ref[...]
        o_ref[...] = jnp.maximum(out, 0.0).astype(o_ref.dtype)


def _footprint_bytes(tkc, n, cp):
    # double-buffered xg + double-buffered w + resident output + gamma/beta
    return (2 * tkc * n + 2 * cp * tkc + 2 * cp * n + 8 * cp) * 4


def _pick_contraction_tile(kc_pad, n, cp, budget_bytes=32 << 20):
    """Largest 128-aligned contraction tile whose block footprint fits the
    budget (32 MiB keeps headroom under v7x's 64 MiB physical VMEM and the
    default scoped limits on v5e/v6e)."""
    cands = [kc_pad] + [t for t in (8192, 4096, 2048, 1024, 512, 256, 128)
                        if t < kc_pad and kc_pad % t == 0]
    for tkc in cands:
        if _footprint_bytes(tkc, n, cp) <= budget_bytes:
            return tkc
    return cands[-1]


def basic_deconvolution_block(x_feats, weights, gamma, beta, src_idx):
    """x_feats: (N, Cin) f32; weights: (K, Cin, Cout) f32; gamma/beta: (Cout,)
    f32; src_idx: (K, N) int32 where src_idx[k, o] is the input row feeding
    output row o under kernel offset k, or N (sentinel -> zero row)."""
    N, Cin = x_feats.shape
    K, _, Cout = weights.shape
    KC = K * Cin
    KC_PAD = -(-KC // 256) * 256          # MXU-native 256 alignment (v6e/v7x)
    CP = -(-Cout // 8) * 8                # sublane alignment for (Cout, N) out

    # ---- gather-into-contraction operands (XLA side; O(K*N*Cin), no O(N^2)) --
    x_aug = jnp.concatenate([x_feats, jnp.zeros((1, Cin), x_feats.dtype)], 0)
    xg = jnp.take(x_aug, src_idx, axis=0)                  # (K, N, Cin)
    xg_t = xg.transpose(0, 2, 1).reshape(KC, N)            # (K*Cin, N)
    xg_t = jnp.pad(xg_t, ((0, KC_PAD - KC), (0, 0)))
    w_t = weights.reshape(KC, Cout).T                      # (Cout, K*Cin)
    w_t = jnp.pad(w_t, ((0, CP - Cout), (0, KC_PAD - KC)))
    g_t = jnp.pad(jnp.reshape(gamma, (Cout, 1)), ((0, CP - Cout), (0, 0)))
    b_t = jnp.pad(jnp.reshape(beta, (Cout, 1)), ((0, CP - Cout), (0, 0)))

    tkc = _pick_contraction_tile(KC_PAD, N, CP)
    n_steps = KC_PAD // tkc
    vmem_limit = int(min(max(2 * _footprint_bytes(tkc, N, CP), 8 << 20),
                         100 << 20))

    out_t = pl.pallas_call(
        _deconv_bn_relu_kernel,
        out_shape=jax.ShapeDtypeStruct((CP, N), jnp.float32),
        grid_spec=pltpu.PrefetchScalarGridSpec(
            num_scalar_prefetch=0,
            grid=(n_steps,),
            in_specs=[
                pl.BlockSpec((tkc, N), lambda k: (k, 0)),   # gathered features
                pl.BlockSpec((CP, tkc), lambda k: (0, k)),  # stacked weights
                pl.BlockSpec((CP, 1), lambda k: (0, 0)),    # gamma
                pl.BlockSpec((CP, 1), lambda k: (0, 0)),    # beta
            ],
            # Constant block index across the contraction axis -> the output
            # stays resident in VMEM and doubles as the accumulator.
            out_specs=pl.BlockSpec((CP, N), lambda k: (0, 0)),
        ),
        compiler_params=pltpu.CompilerParams(
            dimension_semantics=("arbitrary",),
            vmem_limit_bytes=vmem_limit,
        ),
    )(xg_t, w_t, g_t, b_t)
    return out_t[:Cout, :].T                               # (N, Cout)


def build_kernel_maps(coords, ks):
    """Per-offset source-row indices for a stride-1 transposed sparse conv
    (output coords == input coords).  src[k, o] = input row i such that
    coords[i] + offset_k == coords[o], or N (zero-row sentinel) if none."""
    coords = np.asarray(coords)
    N = coords.shape[0]
    half = (ks - 1) // 2
    offsets = [(a - half, b - half, c - half)
               for a in range(ks) for b in range(ks) for c in range(ks)]
    coord_to_idx = {tuple(int(v) for v in c): i for i, c in enumerate(coords)}
    src = np.full((len(offsets), N), N, np.int32)
    for k, d in enumerate(offsets):
        for o in range(N):
            i = coord_to_idx.get((int(coords[o][0] - d[0]),
                                  int(coords[o][1] - d[1]),
                                  int(coords[o][2] - d[2])))
            if i is not None:
                src[k, o] = i
    return jnp.asarray(src)


def reference(x, W, gamma, beta, src_idx):
    N, Cin = x.shape
    x_aug = jnp.concatenate([x, jnp.zeros((1, Cin), x.dtype)], axis=0)
    acc = jnp.zeros((N, W.shape[2]), jnp.float32)
    for k in range(W.shape[0]):
        acc = acc + x_aug[src_idx[k]] @ W[k]
    mean = acc.mean(0)
    var = ((acc - mean) ** 2).mean(0)
    xhat = (acc - mean) / jnp.sqrt(var + 1e-5)
    return jnp.maximum(xhat * gamma + beta, 0.0)


if __name__ == "__main__":
    inc, outc, ks, stride = 16, 32, 3, 1   # module: BasicDeconvolutionBlock(16, 32)
    N = 64                                  # number of active voxels
    K = ks ** 3

    key = jax.random.PRNGKey(0)
    k_feat, k_w, k_coord = jax.random.split(key, 3)

    # deterministic unique voxel coordinates from a 5x5x5 grid
    grid = 5
    all_coords = np.stack(np.meshgrid(np.arange(grid), np.arange(grid),
                                      np.arange(grid), indexing="ij"),
                          axis=-1).reshape(-1, 3)
    perm = np.asarray(jax.random.permutation(k_coord, all_coords.shape[0]))
    coords = all_coords[perm[:N]]

    x = jax.random.normal(k_feat, (N, inc), dtype=jnp.float32)
    W = 0.1 * jax.random.normal(k_w, (K, inc, outc), dtype=jnp.float32)
    gamma = jnp.ones((outc,), dtype=jnp.float32)   # BatchNorm default init
    beta = jnp.zeros((outc,), dtype=jnp.float32)

    src_idx = build_kernel_maps(coords, ks)

    out = basic_deconvolution_block(x, W, gamma, beta, src_idx)
    out = jax.block_until_ready(out)

    ref = reference(x, W, gamma, beta, src_idx)
    np.testing.assert_allclose(np.asarray(out), np.asarray(ref),
                               rtol=1e-4, atol=1e-4)
    print("KERNEL_OK")
</pallas_src>

<mosaic_0001>
module attributes {stable_mosaic.version = 11 : i64} {
  func.func @_deconv_bn_relu_kernel(%arg0: i32, %arg1: memref<512x64xf32, #tpu.memory_space<vmem>>, %arg2: memref<32x512xf32, #tpu.memory_space<vmem>>, %arg3: memref<32x1xf32, #tpu.memory_space<vmem>>, %arg4: memref<32x1xf32, #tpu.memory_space<vmem>>, %arg5: memref<32x64xf32, #tpu.memory_space<vmem>>) attributes {dimension_semantics = [#tpu.dimension_semantics<arbitrary>], iteration_bounds = array<i64: 1>, scalar_prefetch = 0 : i64, scratch_operands = 0 : i64, tpu.core_type = #tpu.core_type<tc>, window_params = [{transform_indices = @transform_0, window_bounds = array<i64: 512, 64>}, {transform_indices = @transform_1, window_bounds = array<i64: 32, 512>}, {pipeline_mode = #tpu.pipeline_mode<synchronous>, transform_indices = @transform_2, window_bounds = array<i64: 32, 1>}, {pipeline_mode = #tpu.pipeline_mode<synchronous>, transform_indices = @transform_3, window_bounds = array<i64: 32, 1>}, {pipeline_mode = #tpu.pipeline_mode<synchronous>, transform_indices = @transform_4, window_bounds = array<i64: 32, 64>}]} {
    %c0_i32 = arith.constant 0 : i32
    %0 = arith.cmpi eq, %arg0, %c0_i32 : i32
    %1 = arith.extui %0 : i1 to i32
    %c0_i32_0 = arith.constant 0 : i32
    %2 = arith.cmpi ne, %1, %c0_i32_0 : i32
    scf.if %2 {
      %cst_10 = arith.constant 0.000000e+00 : f32
      %12 = vector.broadcast %cst_10 : f32 to vector<32x64xf32>
      %c0_11 = arith.constant 0 : index
      %c0_12 = arith.constant 0 : index
      %13 = vector.load %arg5[%c0_11, %c0_12] : memref<32x64xf32, #tpu.memory_space<vmem>>, vector<32x64xf32>
      tpu.vector_store %arg5[%c0_11, %c0_12], %12 {strides = array<i32>} : memref<32x64xf32, #tpu.memory_space<vmem>>, vector<32x64xf32>,
    } else {
    }
    %c0 = arith.constant 0 : index
    %c0_1 = arith.constant 0 : index
    %3 = vector.load %arg5[%c0, %c0_1] : memref<32x64xf32, #tpu.memory_space<vmem>>, vector<32x64xf32>
    %c0_2 = arith.constant 0 : index
    %c0_3 = arith.constant 0 : index
    %4 = vector.load %arg2[%c0_2, %c0_3] : memref<32x512xf32, #tpu.memory_space<vmem>>, vector<32x512xf32>
    %c0_4 = arith.constant 0 : index
    %c0_5 = arith.constant 0 : index
    %5 = vector.load %arg1[%c0_4, %c0_5] : memref<512x64xf32, #tpu.memory_space<vmem>>, vector<512x64xf32>
    %cst = arith.constant dense<0.000000e+00> : vector<32x64xf32>
    %6 = tpu.matmul %4, %5, %cst {dimension_numbers = #tpu.dot_dimension_numbers<[1], [0], [0], [1], [0, 0, 1, 1], [], []>} : vector<32x512xf32>, vector<512x64xf32>, vector<32x64xf32> -> vector<32x64xf32>
    %7 = arith.addf %3, %6 : vector<32x64xf32>
    %c0_6 = arith.constant 0 : index
    %c0_7 = arith.constant 0 : index
    %8 = vector.load %arg5[%c0_6, %c0_7] : memref<32x64xf32, #tpu.memory_space<vmem>>, vector<32x64xf32>
    tpu.vector_store %arg5[%c0_6, %c0_7], %7 {strides = array<i32>} : memref<32x64xf32, #tpu.memory_space<vmem>>, vector<32x64xf32>,
    %c0_i32_8 = arith.constant 0 : i32
    %9 = arith.cmpi eq, %arg0, %c0_i32_8 : i32
    %10 = arith.extui %9 : i1 to i32
    %c0_i32_9 = arith.constant 0 : i32
    %11 = arith.cmpi ne, %10, %c0_i32_9 : i32
    scf.if %11 {
      %c0_10 = arith.constant 0 : index
      %c0_11 = arith.constant 0 : index
      %12 = vector.load %arg5[%c0_10, %c0_11] : memref<32x64xf32, #tpu.memory_space<vmem>>, vector<32x64xf32>
      %cst_12 = arith.constant dense<0.000000e+00> : vector<32xf32>
      %13 = vector.multi_reduction <add>, %12, %cst_12 [1] : vector<32x64xf32> to vector<32xf32>
      %14 = vector.shape_cast %13 : vector<32xf32> to vector<32x1xf32>
      %cst_13 = arith.constant 6.400000e+01 : f32
      %15 = vector.broadcast %cst_13 : f32 to vector<32x1xf32>
      %16 = arith.divf %14, %15 : vector<32x1xf32>
      %17 = vector.broadcast %16 : vector<32x1xf32> to vector<32x64xf32>
      %18 = arith.subf %12, %17 : vector<32x64xf32>
      %19 = arith.mulf %18, %18 : vector<32x64xf32>
      %cst_14 = arith.constant dense<0.000000e+00> : vector<32xf32>
      %20 = vector.multi_reduction <add>, %19, %cst_14 [1] : vector<32x64xf32> to vector<32xf32>
      %21 = vector.shape_cast %20 : vector<32xf32> to vector<32x1xf32>
      %cst_15 = arith.constant 6.400000e+01 : f32
      %22 = vector.broadcast %cst_15 : f32 to vector<32x1xf32>
      %23 = arith.divf %21, %22 : vector<32x1xf32>
      %cst_16 = arith.constant 9.99999974E-6 : f32
      %24 = vector.broadcast %cst_16 : f32 to vector<32x1xf32>
      %25 = arith.addf %23, %24 : vector<32x1xf32>
      %26 = math.rsqrt %25 : vector<32x1xf32>
      %27 = vector.broadcast %26 : vector<32x1xf32> to vector<32x64xf32>
      %28 = arith.mulf %18, %27 : vector<32x64xf32>
      %c0_17 = arith.constant 0 : index
      %c0_18 = arith.constant 0 : index
      %29 = vector.load %arg3[%c0_17, %c0_18] : memref<32x1xf32, #tpu.memory_space<vmem>>, vector<32x1xf32>
      %30 = vector.broadcast %29 : vector<32x1xf32> to vector<32x64xf32>
      %31 = arith.mulf %28, %30 : vector<32x64xf32>
      %c0_19 = arith.constant 0 : index
      %c0_20 = arith.constant 0 : index
      %32 = vector.load %arg4[%c0_19, %c0_20] : memref<32x1xf32, #tpu.memory_space<vmem>>, vector<32x1xf32>
      %33 = vector.broadcast %32 : vector<32x1xf32> to vector<32x64xf32>
      %34 = arith.addf %31, %33 : vector<32x64xf32>
      %cst_21 = arith.constant 0.000000e+00 : f32
      %35 = vector.broadcast %cst_21 : f32 to vector<32x64xf32>
      %36 = arith.maximumf %34, %35 : vector<32x64xf32>
      %c0_22 = arith.constant 0 : index
      %c0_23 = arith.constant 0 : index
      %37 = vector.load %arg5[%c0_22, %c0_23] : memref<32x64xf32, #tpu.memory_space<vmem>>, vector<32x64xf32>
      tpu.vector_store %arg5[%c0_22, %c0_23], %36 {strides = array<i32>} : memref<32x64xf32, #tpu.memory_space<vmem>>, vector<32x64xf32>,
    } else {
    }
    return
  }
  func.func @transform_0(%arg0: i32) -> (i32, i32) {
    %c0_i32 = arith.constant 0 : i32
    %c0_i32_0 = arith.constant 0 : i32
    return %arg0, %c0_i32 : i32, i32
  }
  func.func @transform_1(%arg0: i32) -> (i32, i32) {
    %c0_i32 = arith.constant 0 : i32
    %c0_i32_0 = arith.constant 0 : i32
    return %c0_i32, %arg0 : i32, i32
  }
  func.func @transform_2(%arg0: i32) -> (i32, i32) {
    %c0_i32 = arith.constant 0 : i32
    %c0_i32_0 = arith.constant 0 : i32
    %c0_i32_1 = arith.constant 0 : i32
    return %c0_i32, %c0_i32_0 : i32, i32
  }
  func.func @transform_3(%arg0: i32) -> (i32, i32) {
    %c0_i32 = arith.constant 0 : i32
    %c0_i32_0 = arith.constant 0 : i32
    %c0_i32_1 = arith.constant 0 : i32
    return %c0_i32, %c0_i32_0 : i32, i32
  }
  func.func @transform_4(%arg0: i32) -> (i32, i32) {
    %c0_i32 = arith.constant 0 : i32
    %c0_i32_0 = arith.constant 0 : i32
    %c0_i32_1 = arith.constant 0 : i32
    return %c0_i32, %c0_i32_0 : i32, i32
  }
}

</mosaic_0001>

<llo_original>
// kernel: tpu_custom_call.1
$region0: #{tpu_custom_call.1}
  #allocation0 [shape = 'u32[]', space=smem, size = 0x4, offset = 0x4, fixed_abs, tag = 'smem constant byte address 0x4 - core index']
  #allocation1 [shape = 'u32[72,128]{1,0:T(1,128)}', space=vmem, size = 0x9000, scoped, tag = 'internal scratch']
  %s0 = inlined_call_operand.vmem [shape: f32[512,64], index: 0, kind: input, shape index: {}]
  %s1 = inlined_call_operand.vmem [shape: f32[32,512], index: 1, kind: input, shape index: {}]
  %s2 = inlined_call_operand.vmem [shape: f32[32,1], index: 2, kind: input, shape index: {}]
  %s3 = inlined_call_operand.vmem [shape: f32[32,1], index: 3, kind: input, shape index: {}]
  %s4 = inlined_call_operand.hbm [shape: f32[32,64], index: 4, kind: output, shape index: {}]
  %s5 = sld [smem:[#allocation0]]
  $region34: #{tpu_custom_call.1} parent=0
    _
  %s7 = ssub.s32 1, %s5
  %s8 = scalar_select 0, %s7, %s5
  $region1: #{tpu_custom_call.1} parent=0
    #allocation2 [shape = 'u8[16384]{0}', space=vmem, size = 0x4000, scoped, tag = 'output window, operand 0, single buffered']
    #allocation3 [shape = 's32[1]{0}', space=sflag, size = 0x4, scoped, tag = 'scoped memory for tpu_custom_call.1']
    %9 = vsyncpa [#allocation3], 0
    // Predicated region
    $region2: #{tpu_custom_call.1} parent=1 // pred_check
      _
    $region3: #{tpu_custom_call.1} parent=1 // pred_check_branch
      %11 = sbr.rel (0) target = $region5
    $region4: #{tpu_custom_call.1} parent=1 // pred_region
      _
    $region5: #{tpu_custom_call.1} parent=1 // pred_fallthru
      _
    // Predicated region
    $region6: #{tpu_custom_call.1} parent=1 // pred_check
      _
    $region7: #{tpu_custom_call.1} parent=1 // pred_check_branch
      %13 = sbr.rel (0) target = $region9
    $region8: #{tpu_custom_call.1} parent=1 // pred_region
      _
    $region9: #{tpu_custom_call.1} parent=1 // pred_fallthru
      _
    // Predicated region
    $region10: #{tpu_custom_call.1} parent=1 // pred_check
      _
    $region11: #{tpu_custom_call.1} parent=1 // pred_check_branch
      %15 = sbr.rel (0) target = $region13
    $region12: #{tpu_custom_call.1} parent=1 // pred_region
      _
    $region13: #{tpu_custom_call.1} parent=1 // pred_fallthru
      _
    // Predicated region
    $region14: #{tpu_custom_call.1} parent=1 // pred_check
      _
    $region15: #{tpu_custom_call.1} parent=1 // pred_check_branch
      %17 = sbr.rel (0) target = $region17
    $region16: #{tpu_custom_call.1} parent=1 // pred_region
      _
    $region17: #{tpu_custom_call.1} parent=1 // pred_fallthru
      _
    %p18 = scmp.eq.s32.totalorder 0, 0
    // Predicated region
    $region18: #{tpu_custom_call.1} parent=1 // pred_check
      %p19 = pneg %p18
    $region19: #{tpu_custom_call.1} parent=1 // pred_check_branch
      %21 = sbr.rel (%p19) target = $region21
    $region20: #{tpu_custom_call.1} parent=1 // pred_region
      %vm22 = vcmask 523264
      %23 = vst.msk [vmem:[#allocation2] sm:$0xff] %vm22, 0.0
      %24 = vst.msk [vmem:[#allocation2 + $0x8] sm:$0xff] %vm22, 0.0
      %25 = vst.msk [vmem:[#allocation2 + $0x10] sm:$0xff] %vm22, 0.0
      %26 = vst.msk [vmem:[#allocation2 + $0x18] sm:$0xff] %vm22, 0.0
    $region21: #{tpu_custom_call.1} parent=1 // pred_fallthru
      _
    %v27 = vld [vmem:[#allocation2] sm:$0xff]
    %v28 = vld [vmem:[#allocation2 + $0x8] sm:$0xff]
    %v29 = vld [vmem:[#allocation2 + $0x10] sm:$0xff]
    %v30 = vld [vmem:[#allocation2 + $0x18] sm:$0xff]
    %v31 = vld [vmem:[%s1] sm:$0xff]
    %v32 = vld [vmem:[%s1 + $0x8] sm:$0xff]
    %v33 = vld [vmem:[%s1 + $0x10] sm:$0xff]
    %v34 = vld [vmem:[%s1 + $0x18] sm:$0xff]
    %v35 = vld [vmem:[%s1 + $0x20] sm:$0xff]
    %v36 = vld [vmem:[%s1 + $0x28] sm:$0xff]
    %v37 = vld [vmem:[%s1 + $0x30] sm:$0xff]
    %v38 = vld [vmem:[%s1 + $0x38] sm:$0xff]
    %v39 = vld [vmem:[%s1 + $0x40] sm:$0xff]
    %v40 = vld [vmem:[%s1 + $0x48] sm:$0xff]
    %v41 = vld [vmem:[%s1 + $0x50] sm:$0xff]
    %v42 = vld [vmem:[%s1 + $0x58] sm:$0xff]
    %v43 = vld [vmem:[%s1 + $0x60] sm:$0xff]
    %v44 = vld [vmem:[%s1 + $0x68] sm:$0xff]
    %v45 = vld [vmem:[%s1 + $0x70] sm:$0xff]
    %v46 = vld [vmem:[%s1 + $0x78] sm:$0xff]
    %v47 = vld [vmem:[%s0] sm:$0xff]
    %v48 = vld [vmem:[%s0 + $0x8] sm:$0xff]
    %v49 = vld [vmem:[%s0 + $0x10] sm:$0xff]
    %v50 = vld [vmem:[%s0 + $0x18] sm:$0xff]
    %v51 = vld [vmem:[%s0 + $0x20] sm:$0xff]
    %v52 = vld [vmem:[%s0 + $0x28] sm:$0xff]
    %v53 = vld [vmem:[%s0 + $0x30] sm:$0xff]
    %v54 = vld [vmem:[%s0 + $0x38] sm:$0xff]
    %v55 = vld [vmem:[%s0 + $0x40] sm:$0xff]
    %v56 = vld [vmem:[%s0 + $0x48] sm:$0xff]
    %v57 = vld [vmem:[%s0 + $0x50] sm:$0xff]
    %v58 = vld [vmem:[%s0 + $0x58] sm:$0xff]
    %v59 = vld [vmem:[%s0 + $0x60] sm:$0xff]
    %v60 = vld [vmem:[%s0 + $0x68] sm:$0xff]
    %v61 = vld [vmem:[%s0 + $0x70] sm:$0xff]
    %v62 = vld [vmem:[%s0 + $0x78] sm:$0xff]
    %v63 = vld [vmem:[%s0 + $0x80] sm:$0xff]
    %v64 = vld [vmem:[%s0 + $0x88] sm:$0xff]
    %v65 = vld [vmem:[%s0 + $0x90] sm:$0xff]
    %v66 = vld [vmem:[%s0 + $0x98] sm:$0xff]
    %v67 = vld [vmem:[%s0 + $0xa0] sm:$0xff]
    %v68 = vld [vmem:[%s0 + $0xa8] sm:$0xff]
    %v69 = vld [vmem:[%s0 + $0xb0] sm:$0xff]
    %v70 = vld [vmem:[%s0 + $0xb8] sm:$0xff]
    %v71 = vld [vmem:[%s0 + $0xc0] sm:$0xff]
    %v72 = vld [vmem:[%s0 + $0xc8] sm:$0xff]
    %v73 = vld [vmem:[%s0 + $0xd0] sm:$0xff]
    %v74 = vld [vmem:[%s0 + $0xd8] sm:$0xff]
    %v75 = vld [vmem:[%s0 + $0xe0] sm:$0xff]
    %v76 = vld [vmem:[%s0 + $0xe8] sm:$0xff]
    %v77 = vld [vmem:[%s0 + $0xf0] sm:$0xff]
    %v78 = vld [vmem:[%s0 + $0xf8] sm:$0xff]
    %v79 = vld [vmem:[%s0 + $0x100] sm:$0xff]
    %v80 = vld [vmem:[%s0 + $0x108] sm:$0xff]
    %v81 = vld [vmem:[%s0 + $0x110] sm:$0xff]
    %v82 = vld [vmem:[%s0 + $0x118] sm:$0xff]
    %v83 = vld [vmem:[%s0 + $0x120] sm:$0xff]
    %v84 = vld [vmem:[%s0 + $0x128] sm:$0xff]
    %v85 = vld [vmem:[%s0 + $0x130] sm:$0xff]
    %v86 = vld [vmem:[%s0 + $0x138] sm:$0xff]
    %v87 = vld [vmem:[%s0 + $0x140] sm:$0xff]
    %v88 = vld [vmem:[%s0 + $0x148] sm:$0xff]
    %v89 = vld [vmem:[%s0 + $0x150] sm:$0xff]
    %v90 = vld [vmem:[%s0 + $0x158] sm:$0xff]
    %v91 = vld [vmem:[%s0 + $0x160] sm:$0xff]
    %v92 = vld [vmem:[%s0 + $0x168] sm:$0xff]
    %v93 = vld [vmem:[%s0 + $0x170] sm:$0xff]
    %v94 = vld [vmem:[%s0 + $0x178] sm:$0xff]
    %v95 = vld [vmem:[%s0 + $0x180] sm:$0xff]
    %v96 = vld [vmem:[%s0 + $0x188] sm:$0xff]
    %v97 = vld [vmem:[%s0 + $0x190] sm:$0xff]
    %v98 = vld [vmem:[%s0 + $0x198] sm:$0xff]
    %v99 = vld [vmem:[%s0 + $0x1a0] sm:$0xff]
    %v100 = vld [vmem:[%s0 + $0x1a8] sm:$0xff]
    %v101 = vld [vmem:[%s0 + $0x1b0] sm:$0xff]
    %v102 = vld [vmem:[%s0 + $0x1b8] sm:$0xff]
    %v103 = vld [vmem:[%s0 + $0x1c0] sm:$0xff]
    %v104 = vld [vmem:[%s0 + $0x1c8] sm:$0xff]
    %v105 = vld [vmem:[%s0 + $0x1d0] sm:$0xff]
    %v106 = vld [vmem:[%s0 + $0x1d8] sm:$0xff]
    %v107 = vld [vmem:[%s0 + $0x1e0] sm:$0xff]
    %v108 = vld [vmem:[%s0 + $0x1e8] sm:$0xff]
    %v109 = vld [vmem:[%s0 + $0x1f0] sm:$0xff]
    %v110 = vld [vmem:[%s0 + $0x1f8] sm:$0xff]
    %111 = vmatpush.msra.mxu0 %v62
    %112 = vmatpush.msra.mxu0 %v61
    %113 = vmatpush.msra.mxu0 %v60
    %114 = vmatpush.msra.mxu0 %v59
    %115 = vmatpush.msra.mxu0 %v58
    %116 = vmatpush.msra.mxu0 %v57
    %117 = vmatpush.msra.mxu0 %v56
    %118 = vmatpush.msra.mxu0 %v55
    %119 = vmatpush.msra.mxu0 %v54
    %120 = vmatpush.msra.mxu0 %v53
    %121 = vmatpush.msra.mxu0 %v52
    %122 = vmatpush.msra.mxu0 %v51
    %123 = vmatpush.msra.mxu0 %v50
    %124 = vmatpush.msra.mxu0 %v49
    %125 = vmatpush.msra.mxu0 %v48
    %126 = vmatpush.msra.mxu0 %v47
    %127 = vmatmul.f32.gmra.mxu0 %v31
    %v128 = vpop.f32.mrf.mxu0
    %v129 = vadd.f32 0.0, %v128
    %130 = vmatmul.f32.gmra.mxu0 %v35
    %v131 = vpop.f32.mrf.mxu0
    %v132 = vadd.f32 0.0, %v131
    %133 = vmatmul.f32.gmra.mxu0 %v39
    %v134 = vpop.f32.mrf.mxu0
    %v135 = vadd.f32 0.0, %v134
    %136 = vmatmul.f32.gmra.mxu0 %v43
    %v137 = vpop.f32.mrf.mxu0
    %v138 = vadd.f32 0.0, %v137
    %139 = vdwg.mxu0
    %140 = vmatpush.msra.mxu0 %v78
    %141 = vmatpush.msra.mxu0 %v77
    %142 = vmatpush.msra.mxu0 %v76
    %143 = vmatpush.msra.mxu0 %v75
    %144 = vmatpush.msra.mxu0 %v74
    %145 = vmatpush.msra.mxu0 %v73
    %146 = vmatpush.msra.mxu0 %v72
    %147 = vmatpush.msra.mxu0 %v71
    %148 = vmatpush.msra.mxu0 %v70
    %149 = vmatpush.msra.mxu0 %v69
    %150 = vmatpush.msra.mxu0 %v68
    %151 = vmatpush.msra.mxu0 %v67
    %152 = vmatpush.msra.mxu0 %v66
    %153 = vmatpush.msra.mxu0 %v65
    %154 = vmatpush.msra.mxu0 %v64
    %155 = vmatpush.msra.mxu0 %v63
    %156 = vmatmul.f32.gmra.mxu0 %v32
    %v157 = vpop.f32.mrf.mxu0
    %v158 = vadd.f32 %v129, %v157
    %159 = vmatmul.f32.gmra.mxu0 %v36
    %v160 = vpop.f32.mrf.mxu0
    %v161 = vadd.f32 %v132, %v160
    %162 = vmatmul.f32.gmra.mxu0 %v40
    %v163 = vpop.f32.mrf.mxu0
    %v164 = vadd.f32 %v135, %v163
    %165 = vmatmul.f32.gmra.mxu0 %v44
    %v166 = vpop.f32.mrf.mxu0
    %v167 = vadd.f32 %v138, %v166
    %168 = vdwg.mxu0
    %169 = vmatpush.msra.mxu0 %v94
    %170 = vmatpush.msra.mxu0 %v93
    %171 = vmatpush.msra.mxu0 %v92
    %172 = vmatpush.msra.mxu0 %v91
    %173 = vmatpush.msra.mxu0 %v90
    %174 = vmatpush.msra.mxu0 %v89
    %175 = vmatpush.msra.mxu0 %v88
    %176 = vmatpush.msra.mxu0 %v87
    %177 = vmatpush.msra.mxu0 %v86
    %178 = vmatpush.msra.mxu0 %v85
    %179 = vmatpush.msra.mxu0 %v84
    %180 = vmatpush.msra.mxu0 %v83
    %181 = vmatpush.msra.mxu0 %v82
    %182 = vmatpush.msra.mxu0 %v81
    %183 = vmatpush.msra.mxu0 %v80
    %184 = vmatpush.msra.mxu0 %v79
    %185 = vmatmul.f32.gmra.mxu0 %v33
    %v186 = vpop.f32.mrf.mxu0
    %v187 = vadd.f32 %v158, %v186
    %188 = vmatmul.f32.gmra.mxu0 %v37
    %v189 = vpop.f32.mrf.mxu0
    %v190 = vadd.f32 %v161, %v189
    %191 = vmatmul.f32.gmra.mxu0 %v41
    %v192 = vpop.f32.mrf.mxu0
    %v193 = vadd.f32 %v164, %v192
    %194 = vmatmul.f32.gmra.mxu0 %v45
    %v195 = vpop.f32.mrf.mxu0
    %v196 = vadd.f32 %v167, %v195
    %197 = vdwg.mxu0
    %198 = vmatpush.msra.mxu0 %v110
    %199 = vmatpush.msra.mxu0 %v109
    %200 = vmatpush.msra.mxu0 %v108
    %201 = vmatpush.msra.mxu0 %v107
    %202 = vmatpush.msra.mxu0 %v106
    %203 = vmatpush.msra.mxu0 %v105
    %204 = vmatpush.msra.mxu0 %v104
    %205 = vmatpush.msra.mxu0 %v103
    %206 = vmatpush.msra.mxu0 %v102
    %207 = vmatpush.msra.mxu0 %v101
    %208 = vmatpush.msra.mxu0 %v100
    %209 = vmatpush.msra.mxu0 %v99
    %210 = vmatpush.msra.mxu0 %v98
    %211 = vmatpush.msra.mxu0 %v97
    %212 = vmatpush.msra.mxu0 %v96
    %213 = vmatpush.msra.mxu0 %v95
    %214 = vmatmul.f32.gmra.mxu0 %v34
    %v215 = vpop.f32.mrf.mxu0
    %v216 = vadd.f32 %v187, %v215
    %217 = vmatmul.f32.gmra.mxu0 %v38
    %v218 = vpop.f32.mrf.mxu0
    %v219 = vadd.f32 %v190, %v218
    %220 = vmatmul.f32.gmra.mxu0 %v42
    %v221 = vpop.f32.mrf.mxu0
    %v222 = vadd.f32 %v193, %v221
    %223 = vmatmul.f32.gmra.mxu0 %v46
    %v224 = vpop.f32.mrf.mxu0
    %v225 = vadd.f32 %v196, %v224
    %226 = vdwg.mxu0
    %v227 = vadd.f32 %v27, %v216
    %v228 = vadd.f32 %v28, %v219
    %v229 = vadd.f32 %v29, %v222
    %v230 = vadd.f32 %v30, %v225
    %vm231 = vcmask 523264
    %232 = vst.msk [vmem:[#allocation2] sm:$0xff] %vm231, %v227
    %233 = vst.msk [vmem:[#allocation2 + $0x8] sm:$0xff] %vm231, %v228
    %234 = vst.msk [vmem:[#allocation2 + $0x10] sm:$0xff] %vm231, %v229
    %235 = vst.msk [vmem:[#allocation2 + $0x18] sm:$0xff] %vm231, %v230
    // Predicated region
    $region22: #{tpu_custom_call.1} parent=1 // pred_check
      %p236 = pneg %p18
    $region23: #{tpu_custom_call.1} parent=1 // pred_check_branch
      %238 = sbr.rel (%p236) target = $region25
    $region24: #{tpu_custom_call.1} parent=1 // pred_region
      %v239 = vld [vmem:[#allocation2] sm:$0xff]
      %v240 = vld [vmem:[#allocation2 + $0x8] sm:$0xff]
      %v241 = vld [vmem:[#allocation2 + $0x10] sm:$0xff]
      %v242 = vld [vmem:[#allocation2 + $0x18] sm:$0xff]
      %v243 = vsel %vm231, %v239, 0.0
      %244 = vadd.xlane.f32.xlu0 %v243
      %v245 = vpop.xlane.xlu0 %244
      %v246 = vsel %vm231, %v240, 0.0
      %247 = vadd.xlane.f32.xlu0 %v246
      %v248 = vpop.xlane.xlu0 %247
      %v249 = vsel %vm231, %v241, 0.0
      %250 = vadd.xlane.f32.xlu0 %v249
      %v251 = vpop.xlane.xlu0 %250
      %v252 = vsel %vm231, %v242, 0.0
      %253 = vadd.xlane.f32.xlu0 %v252
      %v254 = vpop.xlane.xlu0 %253
      %v255 = vrcp.pop 64.0
      %v256 = vmul.f32 64.0, %v255
      %v257 = vsub.f32 1.0, %v256
      %v258 = vmul.f32 %v255, %v257
      %v259 = vadd.f32 %v255, %v258
      %vm260 = vweird.f32 %v255
      %v261 = vsel %vm260, %v255, %v259
      %v262 = vmul.f32 %v245, %v261
      %v263 = vmul.f32 %v248, %v261
      %v264 = vmul.f32 %v251, %v261
      %v265 = vmul.f32 %v254, %v261
      %v266 = vsub.f32 %v239, %v262
      %v267 = vsub.f32 %v240, %v263
      %v268 = vsub.f32 %v241, %v264
      %v269 = vsub.f32 %v242, %v265
      %v270 = vmul.f32 %v266, %v266
      %v271 = vmul.f32 %v267, %v267
      %v272 = vmul.f32 %v268, %v268
      %v273 = vmul.f32 %v269, %v269
      %v274 = vsel %vm231, %v270, 0.0
      %275 = vadd.xlane.f32.xlu0 %v274
      %v276 = vpop.xlane.xlu0 %275
      %v277 = vsel %vm231, %v271, 0.0
      %278 = vadd.xlane.f32.xlu0 %v277
      %v279 = vpop.xlane.xlu0 %278
      %v280 = vsel %vm231, %v272, 0.0
      %281 = vadd.xlane.f32.xlu0 %v280
      %v282 = vpop.xlane.xlu0 %281
      %v283 = vsel %vm231, %v273, 0.0
      %284 = vadd.xlane.f32.xlu0 %v283
      %v285 = vpop.xlane.xlu0 %284
      %v286 = vmul.f32 %v276, %v261
      %v287 = vmul.f32 %v279, %v261
      %v288 = vmul.f32 %v282, %v261
      %v289 = vmul.f32 %v285, %v261
      %v290 = vadd.f32 %v286, 1e-05
      %v291 = vadd.f32 %v287, 1e-05
      %v292 = vadd.f32 %v288, 1e-05
      %v293 = vadd.f32 %v289, 1e-05
      %v294 = vrsqrt.pop %v290
      %v295 = vmul.f32 %v294, %v290
      %v296 = vmul.f32 %v295, %v294
      %v297 = vmul.f32 0.5, %v296
      %v298 = vsub.f32 1.5, %v297
      %v299 = vmul.f32 %v294, %v298
      %vm300 = vweird.f32 %v290
      %vm301 = vweird.f32 %v294
      %vm302 = vmor %vm300, %vm301
      %v303 = vsel %vm302, %v294, %v299
      %v304 = vrsqrt.pop %v291
      %v305 = vmul.f32 %v304, %v291
      %v306 = vmul.f32 %v305, %v304
      %v307 = vmul.f32 0.5, %v306
      %v308 = vsub.f32 1.5, %v307
      %v309 = vmul.f32 %v304, %v308
      %vm310 = vweird.f32 %v291
      %vm311 = vweird.f32 %v304
      %vm312 = vmor %vm310, %vm311
      %v313 = vsel %vm312, %v304, %v309
      %v314 = vrsqrt.pop %v292
      %v315 = vmul.f32 %v314, %v292
      %v316 = vmul.f32 %v315, %v314
      %v317 = vmul.f32 0.5, %v316
      %v318 = vsub.f32 1.5, %v317
      %v319 = vmul.f32 %v314, %v318
      %vm320 = vweird.f32 %v292
      %vm321 = vweird.f32 %v314
      %vm322 = vmor %vm320, %vm321
      %v323 = vsel %vm322, %v314, %v319
      %v324 = vrsqrt.pop %v293
      %v325 = vmul.f32 %v324, %v293
      %v326 = vmul.f32 %v325, %v324
      %v327 = vmul.f32 0.5, %v326
      %v328 = vsub.f32 1.5, %v327
      %v329 = vmul.f32 %v324, %v328
      %vm330 = vweird.f32 %v293
      %vm331 = vweird.f32 %v324
      %vm332 = vmor %vm330, %vm331
      %v333 = vsel %vm332, %v324, %v329
      %v334 = vmul.f32 %v266, %v303
      %v335 = vmul.f32 %v267, %v313
      %v336 = vmul.f32 %v268, %v323
      %v337 = vmul.f32 %v269, %v333
      %v338 = vld [vmem:[%s2] sm:$0xff]
      %v339 = vld [vmem:[%s2 + $0x8] sm:$0xff]
      %v340 = vld [vmem:[%s2 + $0x10] sm:$0xff]
      %v341 = vld [vmem:[%s2 + $0x18] sm:$0xff]
      %343 = vset.pattern.permute.xlu0 0
      %344 = vperm.xlu0 %343, %v338
      %v345 = vpop.permute.xlu0 %344
      %348 = vset.pattern.permute.xlu0 0
      %349 = vperm.xlu0 %348, %v339
      %v350 = vpop.permute.xlu0 %349
      %353 = vset.pattern.permute.xlu0 0
      %354 = vperm.xlu0 %353, %v340
      %v355 = vpop.permute.xlu0 %354
      %358 = vset.pattern.permute.xlu0 0
      %359 = vperm.xlu0 %358, %v341
      %v360 = vpop.permute.xlu0 %359
      %v362 = vmul.f32 %v334, %v345
      %v363 = vmul.f32 %v335, %v350
      %v364 = vmul.f32 %v336, %v355
      %v365 = vmul.f32 %v337, %v360
      %v366 = vld [vmem:[%s3] sm:$0xff]
      %v367 = vld [vmem:[%s3 + $0x8] sm:$0xff]
      %v368 = vld [vmem:[%s3 + $0x10] sm:$0xff]
      %v369 = vld [vmem:[%s3 + $0x18] sm:$0xff]
      %371 = vset.pattern.permute.xlu0 0
      %372 = vperm.xlu0 %371, %v366
      %v373 = vpop.permute.xlu0 %372
      %376 = vset.pattern.permute.xlu0 0
      %377 = vperm.xlu0 %376, %v367
      %v378 = vpop.permute.xlu0 %377
      %381 = vset.pattern.permute.xlu0 0
      %382 = vperm.xlu0 %381, %v368
      %v383 = vpop.permute.xlu0 %382
      %386 = vset.pattern.permute.xlu0 0
      %387 = vperm.xlu0 %386, %v369
      %v388 = vpop.permute.xlu0 %387
      %v390 = vadd.f32 %v362, %v373
      %v391 = vadd.f32 %v363, %v378
      %v392 = vadd.f32 %v364, %v383
      %v393 = vadd.f32 %v365, %v388
      %v394 = vmax.f32 %v390, 0.0
      %v395 = vmax.f32 %v391, 0.0
      %v396 = vmax.f32 %v392, 0.0
      %v397 = vmax.f32 %v393, 0.0
      %398 = vst.msk [vmem:[#allocation2] sm:$0xff] %vm231, %v394
      %399 = vst.msk [vmem:[#allocation2 + $0x8] sm:$0xff] %vm231, %v395
      %400 = vst.msk [vmem:[#allocation2 + $0x10] sm:$0xff] %vm231, %v396
      %401 = vst.msk [vmem:[#allocation2 + $0x18] sm:$0xff] %vm231, %v397
    $region25: #{tpu_custom_call.1} parent=1 // pred_fallthru
      _
    // Predicated region
    $region26: #{tpu_custom_call.1} parent=1 // pred_check
      _
    $region27: #{tpu_custom_call.1} parent=1 // pred_check_branch
      %403 = sbr.rel (0) target = $region29
    $region28: #{tpu_custom_call.1} parent=1 // pred_region
      %405 = vsyncadd [#allocation3], 0
      %s406 = sshll.u32 [#allocation2], 4
      %s407 = int_to_ptr.vmem [resolvable:$true] %s406
      %s408 = sshll.u32 %s4, 4
      %s409 = int_to_ptr.hbm [resolvable:$true] %s408
      %414 = dma.vmem_to_hbm [thread:$0]  %s407, 512, %s409, [#allocation3], 128, 128, 8
    $region29: #{tpu_custom_call.1} parent=1 // pred_fallthru
      _
    // Predicated region
    $region30: #{tpu_custom_call.1} parent=1 // pred_check
      _
    $region31: #{tpu_custom_call.1} parent=1 // pred_check_branch
      %416 = sbr.rel (0) target = $region33
    $region32: #{tpu_custom_call.1} parent=1 // pred_region
      %418 = dma.done [#allocation3], 512
    $region33: #{tpu_custom_call.1} parent=1 // pred_fallthru
      _
    %419 = vsyncpa [#allocation3], 1

</llo_original>
